<compile_context>
chip_gen: v7x
topology: tpu7x:2x2x1
jax: 0.10.0
libtpu: 0.0.40
codegen_flags: <defaults>
</compile_context>

<pallas_src>
import math
import functools

import jax
import jax.numpy as jnp
from jax.experimental import pallas as pl
from jax.experimental.pallas import tpu as pltpu


# ---------------------------------------------------------------------------
# Parameter / buffer setup (plain JAX glue, deterministic)
# ---------------------------------------------------------------------------
def make_positional_encoding_buffer(d_model: int, max_len: int = 1536,
                                    dtype=jnp.float32) -> jnp.ndarray:
    """Reproduces the `pe` buffer built in PositionalEncoding.__init__."""
    position = jnp.arange(max_len, dtype=jnp.float32)[:, None]          # [max_len, 1]
    div_term = jnp.exp(jnp.arange(0, d_model, 2, dtype=jnp.float32)
                       * (-math.log(10000.0) / d_model))                # [d_model/2]
    angles = position * div_term                                        # [max_len, d_model/2]
    pe = jnp.zeros((max_len, 1, d_model), dtype=jnp.float32)
    pe = pe.at[:, 0, 0::2].set(jnp.sin(angles))
    pe = pe.at[:, 0, 1::2].set(jnp.cos(angles))
    return pe.astype(dtype)


# ---------------------------------------------------------------------------
# Pallas kernels
# ---------------------------------------------------------------------------
def _bcast_pe(pe_row, batch: int):
    # pe_row: (ts, D) -> (ts, B*D); value at lane b*D+d is pe_row[:, d].
    if batch == 1:
        return pe_row
    return jnp.concatenate([pe_row] * batch, axis=-1)


def _pe_add_kernel(x_ref, pe_ref, o_ref, *, batch: int):
    # x_ref: (ts, B*D) tile, pe_ref: (ts, D) tile.
    o_ref[...] = x_ref[...] + _bcast_pe(pe_ref[...], batch)


def _pe_add_dropout_kernel(x_ref, pe_ref, bits_ref, o_ref, *,
                           batch: int, threshold: int, scale: float):
    y = x_ref[...] + _bcast_pe(pe_ref[...], batch)
    # Integer-threshold compare: P(bits < threshold) == p  -> drop with prob p.
    keep = bits_ref[...] >= jnp.uint32(threshold)
    o_ref[...] = jnp.where(keep, y * jnp.asarray(scale, y.dtype), jnp.zeros_like(y))


# ---------------------------------------------------------------------------
# Wrapper
# ---------------------------------------------------------------------------
def _pick_seq_tile(seq_len: int, row_bytes: int, target_bytes: int = 1 << 20) -> int:
    """Seq tile sized so the x/out tile is ~1 MiB, aligned to 8 sublanes."""
    if seq_len <= 8:
        return seq_len
    ts = max(1, target_bytes // max(row_bytes, 1))
    ts = max(8, (ts // 8) * 8)
    return int(min(ts, seq_len))


def positional_encoding_forward(x: jnp.ndarray,
                                pe: jnp.ndarray,
                                *,
                                p: float = 0.1,
                                training: bool = False,
                                rng_key=None,
                                seq_tile: int | None = None) -> jnp.ndarray:
    """x: [S, B, D]; pe: [max_len, 1, D] (or [max_len, D]) with max_len >= S."""
    S, B, D = x.shape
    dt = x.dtype
    itemsize = jnp.dtype(dt).itemsize

    # Free, row-major reshapes: lane axis becomes B*D (lane-dense stores/loads).
    x2 = x.reshape(S, B * D)
    pe2 = pe.reshape(pe.shape[0], D)
    if pe2.dtype != dt:
        pe2 = pe2.astype(dt)          # keep in-kernel math in the input dtype

    ts = seq_tile if seq_tile is not None else _pick_seq_tile(S, B * D * itemsize)
    grid = (pl.cdiv(S, ts),)

    x_spec = pl.BlockSpec((ts, B * D), lambda i: (i, 0))
    pe_spec = pl.BlockSpec((ts, D), lambda i: (i, 0))     # window of pe; no host slice copy
    o_spec = pl.BlockSpec((ts, B * D), lambda i: (i, 0))
    out_shape = jax.ShapeDtypeStruct((S, B * D), dt)
    cparams = pltpu.CompilerParams(dimension_semantics=("parallel",))

    if (not training) or p == 0.0:
        cost = pl.CostEstimate(flops=S * B * D, transcendentals=0,
                               bytes_accessed=(2 * S * B * D + S * D) * itemsize)
        out2 = pl.pallas_call(
            functools.partial(_pe_add_kernel, batch=B),
            out_shape=out_shape,
            grid_spec=pltpu.PrefetchScalarGridSpec(
                num_scalar_prefetch=0, grid=grid,
                in_specs=[x_spec, pe_spec], out_specs=o_spec),
            compiler_params=cparams,
            cost_estimate=cost,
        )(x2, pe2)
        return out2.reshape(S, B, D)

    # Training-mode inverted dropout (RNG stream differs from torch's nn.Dropout).
    if rng_key is None:
        rng_key = jax.random.PRNGKey(0)
    bits = jax.random.bits(rng_key, (S, B * D), dtype=jnp.uint32)
    threshold = min(int(round(p * 2.0 ** 32)), 2 ** 32 - 1)
    scale = 1.0 / (1.0 - p)

    bits_spec = pl.BlockSpec((ts, B * D), lambda i: (i, 0))
    cost = pl.CostEstimate(
        flops=3 * S * B * D, transcendentals=0,
        bytes_accessed=(2 * S * B * D + S * D) * itemsize + 4 * S * B * D)
    out2 = pl.pallas_call(
        functools.partial(_pe_add_dropout_kernel, batch=B,
                          threshold=threshold, scale=scale),
        out_shape=out_shape,
        grid_spec=pltpu.PrefetchScalarGridSpec(
            num_scalar_prefetch=0, grid=grid,
            in_specs=[x_spec, pe_spec, bits_spec], out_specs=o_spec),
        compiler_params=cparams,
        cost_estimate=cost,
    )(x2, pe2, bits)
    return out2.reshape(S, B, D)


# ---------------------------------------------------------------------------
# Demo / self-check
# ---------------------------------------------------------------------------
if __name__ == "__main__":
    d_model = 32
    max_len = 1536
    seq_len = 8
    batch = 2
    p = 0.1

    key = jax.random.PRNGKey(0)
    x = jax.random.normal(key, (seq_len, batch, d_model), dtype=jnp.float32)
    pe = make_positional_encoding_buffer(d_model, max_len)

    ref = x + pe[:seq_len]                     # pe[:S] broadcasts over batch

    # Eval mode (dropout = identity) — deterministic, exact check.
    out = positional_encoding_forward(x, pe, p=p, training=False)
    out = jax.block_until_ready(out)
    assert out.shape == (seq_len, batch, d_model)
    assert jnp.allclose(out, ref, atol=1e-6, rtol=1e-6), "mismatch vs reference"

    # Training mode: each output element is 0 (dropped) or ref/(1-p) (kept).
    out_train = positional_encoding_forward(
        x, pe, p=p, training=True, rng_key=jax.random.PRNGKey(123))
    out_train = jax.block_until_ready(out_train)
    assert out_train.shape == (seq_len, batch, d_model)
    kept_val = ref / (1.0 - p)
    ok = jnp.isclose(out_train, 0.0, atol=1e-6) | jnp.isclose(out_train, kept_val,
                                                              rtol=1e-5, atol=1e-5)
    assert bool(jnp.all(ok)), "dropout output is neither 0 nor scaled value"

    print("KERNEL_OK")
</pallas_src>

<mosaic_0001>
module attributes {stable_mosaic.version = 11 : i64} {
  func.func @_pe_add_kernel(%arg0: i32, %arg1: memref<8x64xf32, #tpu.memory_space<vmem>>, %arg2: memref<8x32xf32, #tpu.memory_space<vmem>>, %arg3: memref<8x64xf32, #tpu.memory_space<vmem>>) attributes {dimension_semantics = [#tpu.dimension_semantics<parallel>], iteration_bounds = array<i64: 1>, scalar_prefetch = 0 : i64, scratch_operands = 0 : i64, tpu.core_type = #tpu.core_type<tc>, window_params = [{transform_indices = @transform_0, window_bounds = array<i64: 8, 64>}, {transform_indices = @transform_1, window_bounds = array<i64: 8, 32>}, {transform_indices = @transform_2, window_bounds = array<i64: 8, 64>}]} {
    %c0 = arith.constant 0 : index
    %c0_0 = arith.constant 0 : index
    %0 = vector.load %arg1[%c0, %c0_0] : memref<8x64xf32, #tpu.memory_space<vmem>>, vector<8x64xf32>
    %c0_1 = arith.constant 0 : index
    %c0_2 = arith.constant 0 : index
    %1 = vector.load %arg2[%c0_1, %c0_2] : memref<8x32xf32, #tpu.memory_space<vmem>>, vector<8x32xf32>
    %2 = tpu.concatenate %1, %1 in 1 : vector<8x32xf32>, vector<8x32xf32> -> vector<8x64xf32>
    %3 = arith.addf %0, %2 : vector<8x64xf32>
    %c0_3 = arith.constant 0 : index
    %c0_4 = arith.constant 0 : index
    %4 = vector.load %arg3[%c0_3, %c0_4] : memref<8x64xf32, #tpu.memory_space<vmem>>, vector<8x64xf32>
    tpu.vector_store %arg3[%c0_3, %c0_4], %3 {strides = array<i32>} : memref<8x64xf32, #tpu.memory_space<vmem>>, vector<8x64xf32>,
    return
  }
  func.func @transform_0(%arg0: i32) -> (i32, i32) {
    %c0_i32 = arith.constant 0 : i32
    %c0_i32_0 = arith.constant 0 : i32
    return %arg0, %c0_i32 : i32, i32
  }
  func.func @transform_1(%arg0: i32) -> (i32, i32) {
    %c0_i32 = arith.constant 0 : i32
    %c0_i32_0 = arith.constant 0 : i32
    return %arg0, %c0_i32 : i32, i32
  }
  func.func @transform_2(%arg0: i32) -> (i32, i32) {
    %c0_i32 = arith.constant 0 : i32
    %c0_i32_0 = arith.constant 0 : i32
    return %arg0, %c0_i32 : i32, i32
  }
}

</mosaic_0001>

<llo_original>
// kernel: tpu_custom_call.1
$region0: #{tpu_custom_call.1}
  #allocation0 [shape = 'u32[]', space=smem, size = 0x4, offset = 0x4, fixed_abs, tag = 'smem constant byte address 0x4 - core index']
  #allocation1 [shape = 'u32[144,128]{1,0:T(1,128)}', space=vmem, size = 0x12000, scoped, tag = 'internal scratch']
  %s0 = inlined_call_operand.vmem [shape: f32[8,64], index: 0, kind: input, shape index: {}]
  %s1 = inlined_call_operand.vmem [shape: f32[1536,32], index: 1, kind: input, shape index: {}]
  %s2 = inlined_call_operand.hbm [shape: f32[8,64], index: 2, kind: output, shape index: {}]
  %s3 = sld [smem:[#allocation0]]
  $region18: #{tpu_custom_call.1} parent=0
    _
  %s5 = ssub.s32 1, %s3
  %s6 = scalar_select 0, %s5, %s3
  $region1: #{tpu_custom_call.1} parent=0
    #allocation2 [shape = 'u8[4096]{0}', space=vmem, size = 0x1000, scoped, tag = 'output window, operand 0, single buffered']
    #allocation3 [shape = 's32[1]{0}', space=sflag, size = 0x4, scoped, tag = 'scoped memory for tpu_custom_call.1']
    %7 = vsyncpa [#allocation3], 0
    // Predicated region
    $region2: #{tpu_custom_call.1} parent=1 // pred_check
      _
    $region3: #{tpu_custom_call.1} parent=1 // pred_check_branch
      %9 = sbr.rel (0) target = $region5
    $region4: #{tpu_custom_call.1} parent=1 // pred_region
      _
    $region5: #{tpu_custom_call.1} parent=1 // pred_fallthru
      _
    // Predicated region
    $region6: #{tpu_custom_call.1} parent=1 // pred_check
      _
    $region7: #{tpu_custom_call.1} parent=1 // pred_check_branch
      %11 = sbr.rel (0) target = $region9
    $region8: #{tpu_custom_call.1} parent=1 // pred_region
      _
    $region9: #{tpu_custom_call.1} parent=1 // pred_fallthru
      _
    %v12 = vld [vmem:[%s0] sm:$0xff]
    %v13 = vld [vmem:[%s1] sm:$0xff]
    %15 = vrot.lane.b32.xlu0 %v13, 32
    %v16 = vpop.permute.xlu0 %15
    %vm18 = vcmask 261120
    %v19 = vsel %vm18, %v13, %v16
    %v20 = vadd.f32 %v12, %v19
    %vm21 = vcmask 523264
    %22 = vst.msk [vmem:[#allocation2] sm:$0xff] %vm21, %v20
    // Predicated region
    $region10: #{tpu_custom_call.1} parent=1 // pred_check
      _
    $region11: #{tpu_custom_call.1} parent=1 // pred_check_branch
      %24 = sbr.rel (0) target = $region13
    $region12: #{tpu_custom_call.1} parent=1 // pred_region
      %s26 = ssub.s32 128, 128
      %27 = vsyncadd [#allocation3], %s26
      %s29 = sshll.u32 [#allocation2], 4
      %s30 = int_to_ptr.vmem [resolvable:$true] %s29
      %32 = dma.vmem_to_hbm [thread:$0]  %s30, 128, %s2, [#allocation3]
    $region13: #{tpu_custom_call.1} parent=1 // pred_fallthru
      _
    // Predicated region
    $region14: #{tpu_custom_call.1} parent=1 // pred_check
      _
    $region15: #{tpu_custom_call.1} parent=1 // pred_check_branch
      %34 = sbr.rel (0) target = $region17
    $region16: #{tpu_custom_call.1} parent=1 // pred_region
      %35 = dma.done [#allocation3], 128
    $region17: #{tpu_custom_call.1} parent=1 // pred_fallthru
      _
    %36 = vsyncpa [#allocation3], 1

</llo_original>
